<compile_context>
chip_gen: v7x
topology: tpu7x:2x2x1
jax: 0.10.0
libtpu: 0.0.40
codegen_flags: <defaults>
</compile_context>

<pallas_src>
import functools

import jax
import jax.numpy as jnp
from jax import lax
from jax.experimental import pallas as pl
from jax.experimental.pallas import tpu as pltpu


def _round_up(x, m):
    return ((x + m - 1) // m) * m


def _margin_loss_kernel(scores_ref, diag_col_ref, diag_row_ref,
                        im_vals_ref, im_idx_ref, s_vals_ref, *,
                        margin, n, tm, use_s, use_im, max_violation):
    """Processes one (tm, n) row-block of the t2i score matrix."""
    row_start = pl.program_id(0) * tm

    s = scores_ref[...].astype(jnp.float32)                # (tm, n)
    ms = s + jnp.float32(margin)                           # shared by both hinges
    rows = lax.broadcasted_iota(jnp.int32, (tm, n), 0)     # local row id
    cols = lax.broadcasted_iota(jnp.int32, (tm, n), 1)     # column id
    grow = rows + row_start                                # global row id
    mask_off = (cols == grow) | (grow >= n)                # diagonal + row padding

    if use_im:  # direction in ['t2i', 'bidir'] : cost_im = clamp(margin + s - d1, 0)
        d1 = diag_col_ref[...].astype(jnp.float32)          # (tm, 1), implicit bcast
        cost_im = jnp.maximum(ms - d1, 0.0)
        cost_im = jnp.where(mask_off, 0.0, cost_im)
        if max_violation:
            row_max = jnp.max(cost_im, axis=1)                               # (tm,)
            # first column attaining the row max (torch first-occurrence semantics)
            idx = jnp.min(jnp.where(cost_im == row_max[:, None], cols, n), axis=1)
            im_vals_ref[...] = row_max.reshape(1, 1, tm)
            im_idx_ref[...] = idx.astype(jnp.int32).reshape(1, 1, tm)
        else:
            im_vals_ref[...] = jnp.sum(cost_im, axis=1).reshape(1, 1, tm)
            im_idx_ref[...] = jnp.zeros((1, 1, tm), jnp.int32)
    else:
        im_vals_ref[...] = jnp.zeros((1, 1, tm), jnp.float32)
        im_idx_ref[...] = jnp.zeros((1, 1, tm), jnp.int32)

    if use_s:   # direction in ['i2t', 'bidir'] : cost_s = clamp(margin + s - d2, 0)
        d2 = diag_row_ref[...].astype(jnp.float32)          # (1, n), implicit bcast
        cost_s = jnp.maximum(ms - d2, 0.0)
        cost_s = jnp.where(mask_off, 0.0, cost_s)
        if max_violation:
            s_vals_ref[...] = jnp.max(cost_s, axis=0).reshape(1, 1, n)   # partial col max
        else:
            s_vals_ref[...] = jnp.sum(cost_s, axis=0).reshape(1, 1, n)   # partial col sum
    else:
        s_vals_ref[...] = jnp.zeros((1, 1, n), jnp.float32)


def margin_ranking_loss_adv(scores, *, margin=0.2, max_violation=True,
                            cost_style='sum', direction='t2i', tm=None):
    """Pallas implementation of MarginRankingLoss_adv.forward.

    Returns (loss_scalar, indices_im of shape (N, 1), int32).
    NOTE: like the PyTorch module, a meaningful `indices_im` requires
    max_violation=True and direction in ['t2i', 'bidir'].
    """
    N = scores.shape[0]
    assert scores.shape == (N, N)
    use_im = direction in ('t2i', 'bidir')
    use_s = direction in ('i2t', 'bidir')

    itemsize = jnp.dtype(scores.dtype).itemsize
    if tm is None:
        # Cap the row tile so the (double-buffered) native tile + f32 working set
        # stays well inside scoped VMEM on every generation (incl. v7x's 64 MiB).
        bytes_per_row = N * (itemsize + 4)
        tm_cap = max(8, ((8 << 20) // max(bytes_per_row, 1)) // 8 * 8)
        tm = min(256, tm_cap, _round_up(N, 8))
    tm = max(8, _round_up(min(tm, _round_up(N, 8)), 8))
    num_blocks = (N + tm - 1) // tm

    # Precompute the diagonal once (O(N) traffic) instead of per-block masked sums.
    diag = jnp.diagonal(scores)
    diag_col = diag.reshape(N, 1)
    diag_row = diag.reshape(1, N)

    kernel = functools.partial(
        _margin_loss_kernel,
        margin=float(margin), n=N, tm=tm,
        use_s=use_s, use_im=use_im, max_violation=bool(max_violation))

    cost = pl.CostEstimate(
        flops=6 * N * N,
        transcendentals=0,
        bytes_accessed=N * N * itemsize + 2 * N * itemsize
        + num_blocks * (2 * tm + N) * 4)

    im_vals, im_idx, s_vals = pl.pallas_call(
        kernel,
        out_shape=(jax.ShapeDtypeStruct((num_blocks, 1, tm), jnp.float32),
                   jax.ShapeDtypeStruct((num_blocks, 1, tm), jnp.int32),
                   jax.ShapeDtypeStruct((num_blocks, 1, N), jnp.float32)),
        grid=(num_blocks,),
        in_specs=[pl.BlockSpec((tm, N), lambda i: (i, 0)),      # scores (native dtype)
                  pl.BlockSpec((tm, 1), lambda i: (i, 0)),      # diag[i] column view
                  pl.BlockSpec((1, N), lambda i: (0, 0))],      # diag[j] row view
        out_specs=(pl.BlockSpec((1, 1, tm), lambda i: (i, 0, 0)),
                   pl.BlockSpec((1, 1, tm), lambda i: (i, 0, 0)),
                   pl.BlockSpec((1, 1, N), lambda i: (i, 0, 0))),
        compiler_params=pltpu.CompilerParams(
            dimension_semantics=("parallel",)),
        cost_estimate=cost,
    )(scores, diag_col, diag_row)

    # ---- tiny O(N) final reductions in the wrapper (keeps the grid axis parallel) ----
    if use_im:
        vals_im = im_vals.reshape(num_blocks * tm)[:N]
        if max_violation:
            cost_im_total = jnp.sum(vals_im) if cost_style == 'sum' else jnp.mean(vals_im)
        else:
            total = jnp.sum(vals_im)
            cost_im_total = total if cost_style == 'sum' else total / (N * N)
    else:
        cost_im_total = jnp.float32(0.0)

    if use_s:
        s_part = s_vals.reshape(num_blocks, N)
        if max_violation:
            col_vals = jnp.max(s_part, axis=0)
            cost_s_total = jnp.sum(col_vals) if cost_style == 'sum' else jnp.mean(col_vals)
        else:
            total = jnp.sum(s_part)
            cost_s_total = total if cost_style == 'sum' else total / (N * N)
    else:
        cost_s_total = jnp.float32(0.0)

    loss = cost_s_total + cost_im_total

    # TODO(synk): when not (use_im and max_violation) the PyTorch module crashes
    # (indices_im is None); we return a zero index vector to keep a static signature.
    idx = im_idx.reshape(num_blocks * tm)[:N].reshape(N, 1)
    return loss, idx


def _reference(scores, margin=0.2, max_violation=True, cost_style='sum',
               direction='t2i'):
    scores = scores.astype(jnp.float32)
    N = scores.shape[0]
    diag = jnp.diag(scores).reshape(N, 1)
    I = jnp.eye(N, dtype=bool)
    cost_s = None
    cost_im = None
    indices_im = None
    if direction in ('t2i', 'bidir'):
        cost_im = jnp.where(I, 0.0, jnp.maximum(margin + scores - diag, 0.0))
    if direction in ('i2t', 'bidir'):
        cost_s = jnp.where(I, 0.0, jnp.maximum(margin + scores - diag.T, 0.0))
    if max_violation:
        if cost_s is not None:
            cost_s = jnp.max(cost_s, axis=0)
        if cost_im is not None:
            indices_im = jnp.argmax(cost_im, axis=1)
            cost_im = jnp.max(cost_im, axis=1)
    if cost_s is None:
        cost_s = jnp.zeros((1,), jnp.float32)
    if cost_im is None:
        cost_im = jnp.zeros((1,), jnp.float32)
    red = jnp.sum if cost_style == 'sum' else jnp.mean
    loss = red(cost_s) + red(cost_im)
    idx = None if indices_im is None else indices_im.astype(jnp.int32).reshape(N, 1)
    return loss, idx


if __name__ == "__main__":
    key = jax.random.PRNGKey(0)
    N = 8
    scores = jax.random.normal(key, (N, N), dtype=jnp.float32)

    # t2i / sum / max_violation (the configuration that also yields indices)
    loss, idx = margin_ranking_loss_adv(
        scores, margin=0.2, max_violation=True, cost_style='sum', direction='t2i')
    jax.block_until_ready((loss, idx))
    ref_loss, ref_idx = _reference(scores, margin=0.2, max_violation=True,
                                   cost_style='sum', direction='t2i')
    assert jnp.allclose(loss, ref_loss, rtol=1e-5, atol=1e-5), (loss, ref_loss)
    assert jnp.all(idx == ref_idx), (idx, ref_idx)

    # bidir / mean / max_violation
    loss2, idx2 = margin_ranking_loss_adv(
        scores, margin=0.2, max_violation=True, cost_style='mean', direction='bidir')
    jax.block_until_ready((loss2, idx2))
    ref_loss2, ref_idx2 = _reference(scores, margin=0.2, max_violation=True,
                                     cost_style='mean', direction='bidir')
    assert jnp.allclose(loss2, ref_loss2, rtol=1e-5, atol=1e-5), (loss2, ref_loss2)
    assert jnp.all(idx2 == ref_idx2), (idx2, ref_idx2)

    # t2i / sum / no max_violation (loss only; the torch module would crash on idx)
    loss3, _ = margin_ranking_loss_adv(
        scores, margin=0.2, max_violation=False, cost_style='sum', direction='t2i')
    jax.block_until_ready(loss3)
    ref_loss3, _ = _reference(scores, margin=0.2, max_violation=False,
                              cost_style='sum', direction='t2i')
    assert jnp.allclose(loss3, ref_loss3, rtol=1e-5, atol=1e-5), (loss3, ref_loss3)

    # Ragged / multi-block path: N not a multiple of the tile, tm forced small.
    N2 = 12
    scores2 = jax.random.normal(jax.random.PRNGKey(1), (N2, N2), dtype=jnp.float32)
    loss4, idx4 = margin_ranking_loss_adv(
        scores2, margin=0.2, max_violation=True, cost_style='sum',
        direction='bidir', tm=8)
    jax.block_until_ready((loss4, idx4))
    ref_loss4, ref_idx4 = _reference(scores2, margin=0.2, max_violation=True,
                                     cost_style='sum', direction='bidir')
    assert jnp.allclose(loss4, ref_loss4, rtol=1e-5, atol=1e-5), (loss4, ref_loss4)
    assert jnp.all(idx4 == ref_idx4), (idx4, ref_idx4)

    # i2t / mean / no max_violation (loss only)
    loss5, _ = margin_ranking_loss_adv(
        scores, margin=0.2, max_violation=False, cost_style='mean', direction='i2t')
    jax.block_until_ready(loss5)
    ref_loss5, _ = _reference(scores, margin=0.2, max_violation=False,
                              cost_style='mean', direction='i2t')
    assert jnp.allclose(loss5, ref_loss5, rtol=1e-5, atol=1e-5), (loss5, ref_loss5)

    print("KERNEL_OK")
</pallas_src>

<mosaic_0001>
module attributes {stable_mosaic.version = 11 : i64} {
  func.func @_margin_loss_kernel(%arg0: i32, %arg1: memref<8x8xf32, #tpu.memory_space<vmem>>, %arg2: memref<8x1xf32, #tpu.memory_space<vmem>>, %arg3: memref<1x8xf32, #tpu.memory_space<vmem>>, %arg4: memref<1x1x8xf32, #tpu.memory_space<vmem>>, %arg5: memref<1x1x8xi32, #tpu.memory_space<vmem>>, %arg6: memref<1x1x8xf32, #tpu.memory_space<vmem>>) attributes {dimension_semantics = [#tpu.dimension_semantics<parallel>], iteration_bounds = array<i64: 1>, scalar_prefetch = 0 : i64, scratch_operands = 0 : i64, tpu.core_type = #tpu.core_type<tc>, window_params = [{transform_indices = @transform_0, window_bounds = array<i64: 8, 8>}, {transform_indices = @transform_1, window_bounds = array<i64: 8, 1>}, {pipeline_mode = #tpu.pipeline_mode<synchronous>, transform_indices = @transform_2, window_bounds = array<i64: 1, 8>}, {transform_indices = @transform_3, window_bounds = array<i64: 1, 1, 8>}, {transform_indices = @transform_4, window_bounds = array<i64: 1, 1, 8>}, {transform_indices = @transform_5, window_bounds = array<i64: 1, 1, 8>}]} {
    %c8_i32 = arith.constant 8 : i32
    %0 = arith.muli %arg0, %c8_i32 : i32
    %c0 = arith.constant 0 : index
    %c0_0 = arith.constant 0 : index
    %1 = vector.load %arg1[%c0, %c0_0] : memref<8x8xf32, #tpu.memory_space<vmem>>, vector<8x8xf32>
    %cst = arith.constant 2.000000e-01 : f32
    %2 = vector.broadcast %cst : f32 to vector<8x8xf32>
    %3 = arith.addf %1, %2 : vector<8x8xf32>
    %4 = tpu.iota {dimensions = array<i32: 0>} : vector<8x8xi32>
    %5 = tpu.iota {dimensions = array<i32: 1>} : vector<8x8xi32>
    %6 = vector.broadcast %0 : i32 to vector<8x8xi32>
    %7 = arith.addi %4, %6 : vector<8x8xi32>
    %8 = arith.cmpi eq, %5, %7 : vector<8x8xi32>
    %c8_i32_1 = arith.constant 8 : i32
    %9 = vector.broadcast %c8_i32_1 : i32 to vector<8x8xi32>
    %10 = arith.cmpi sge, %7, %9 : vector<8x8xi32>
    %11 = arith.ori %8, %10 : vector<8x8xi1>
    %c0_2 = arith.constant 0 : index
    %c0_3 = arith.constant 0 : index
    %12 = vector.load %arg2[%c0_2, %c0_3] : memref<8x1xf32, #tpu.memory_space<vmem>>, vector<8x1xf32>
    %13 = vector.broadcast %12 : vector<8x1xf32> to vector<8x8xf32>
    %14 = arith.subf %3, %13 : vector<8x8xf32>
    %cst_4 = arith.constant 0.000000e+00 : f32
    %15 = vector.broadcast %cst_4 : f32 to vector<8x8xf32>
    %16 = arith.maximumf %14, %15 : vector<8x8xf32>
    %cst_5 = arith.constant 0.000000e+00 : f32
    %17 = vector.broadcast %cst_5 : f32 to vector<8x8xf32>
    %18 = arith.select %11, %17, %16 : vector<8x8xi1>, vector<8x8xf32>
    %cst_6 = arith.constant dense<0xFF800000> : vector<8xf32>
    %19 = vector.multi_reduction <maximumf>, %18, %cst_6 [1] : vector<8x8xf32> to vector<8xf32>
    %20 = vector.shape_cast %19 : vector<8xf32> to vector<8x1xf32>
    %21 = vector.broadcast %20 : vector<8x1xf32> to vector<8x8xf32>
    %22 = arith.cmpf oeq, %18, %21 : vector<8x8xf32>
    %c8_i32_7 = arith.constant 8 : i32
    %23 = vector.broadcast %c8_i32_7 : i32 to vector<8x8xi32>
    %24 = arith.select %22, %5, %23 : vector<8x8xi1>, vector<8x8xi32>
    %cst_8 = arith.constant dense<2147483647> : vector<8xi32>
    %25 = vector.multi_reduction <minsi>, %24, %cst_8 [1] : vector<8x8xi32> to vector<8xi32>
    %26 = vector.shape_cast %19 : vector<8xf32> to vector<1x1x8xf32>
    %c0_9 = arith.constant 0 : index
    %c0_10 = arith.constant 0 : index
    %c0_11 = arith.constant 0 : index
    %27 = vector.load %arg4[%c0_9, %c0_10, %c0_11] : memref<1x1x8xf32, #tpu.memory_space<vmem>>, vector<1x1x8xf32>
    tpu.vector_store %arg4[%c0_9, %c0_10, %c0_11], %26 {strides = array<i32>} : memref<1x1x8xf32, #tpu.memory_space<vmem>>, vector<1x1x8xf32>,
    %28 = vector.shape_cast %25 : vector<8xi32> to vector<1x1x8xi32>
    %c0_12 = arith.constant 0 : index
    %c0_13 = arith.constant 0 : index
    %c0_14 = arith.constant 0 : index
    %29 = vector.load %arg5[%c0_12, %c0_13, %c0_14] : memref<1x1x8xi32, #tpu.memory_space<vmem>>, vector<1x1x8xi32>
    tpu.vector_store %arg5[%c0_12, %c0_13, %c0_14], %28 {strides = array<i32>} : memref<1x1x8xi32, #tpu.memory_space<vmem>>, vector<1x1x8xi32>,
    %cst_15 = arith.constant 0.000000e+00 : f32
    %30 = vector.broadcast %cst_15 : f32 to vector<1x1x8xf32>
    %c0_16 = arith.constant 0 : index
    %c0_17 = arith.constant 0 : index
    %c0_18 = arith.constant 0 : index
    %31 = vector.load %arg6[%c0_16, %c0_17, %c0_18] : memref<1x1x8xf32, #tpu.memory_space<vmem>>, vector<1x1x8xf32>
    tpu.vector_store %arg6[%c0_16, %c0_17, %c0_18], %30 {strides = array<i32>} : memref<1x1x8xf32, #tpu.memory_space<vmem>>, vector<1x1x8xf32>,
    return
  }
  func.func @transform_0(%arg0: i32) -> (i32, i32) {
    %c0_i32 = arith.constant 0 : i32
    %c0_i32_0 = arith.constant 0 : i32
    return %arg0, %c0_i32 : i32, i32
  }
  func.func @transform_1(%arg0: i32) -> (i32, i32) {
    %c0_i32 = arith.constant 0 : i32
    %c0_i32_0 = arith.constant 0 : i32
    return %arg0, %c0_i32 : i32, i32
  }
  func.func @transform_2(%arg0: i32) -> (i32, i32) {
    %c0_i32 = arith.constant 0 : i32
    %c0_i32_0 = arith.constant 0 : i32
    %c0_i32_1 = arith.constant 0 : i32
    return %c0_i32, %c0_i32_0 : i32, i32
  }
  func.func @transform_3(%arg0: i32) -> (i32, i32, i32) {
    %c0_i32 = arith.constant 0 : i32
    %c0_i32_0 = arith.constant 0 : i32
    %c0_i32_1 = arith.constant 0 : i32
    return %arg0, %c0_i32, %c0_i32_0 : i32, i32, i32
  }
  func.func @transform_4(%arg0: i32) -> (i32, i32, i32) {
    %c0_i32 = arith.constant 0 : i32
    %c0_i32_0 = arith.constant 0 : i32
    %c0_i32_1 = arith.constant 0 : i32
    return %arg0, %c0_i32, %c0_i32_0 : i32, i32, i32
  }
  func.func @transform_5(%arg0: i32) -> (i32, i32, i32) {
    %c0_i32 = arith.constant 0 : i32
    %c0_i32_0 = arith.constant 0 : i32
    %c0_i32_1 = arith.constant 0 : i32
    return %arg0, %c0_i32, %c0_i32_0 : i32, i32, i32
  }
}

</mosaic_0001>

<llo_original>
// kernel: tpu_custom_call.1
$region0: #{tpu_custom_call.1}
  #allocation0 [shape = 'u32[]', space=smem, size = 0x4, offset = 0x4, fixed_abs, tag = 'smem constant byte address 0x4 - core index']
  #allocation1 [shape = 'u32[144,128]{1,0:T(1,128)}', space=vmem, size = 0x12000, scoped, tag = 'internal scratch']
  %s0 = inlined_call_operand.vmem [shape: f32[8,8], index: 0, kind: input, shape index: {}]
  %s1 = inlined_call_operand.vmem [shape: f32[8,1], index: 1, kind: input, shape index: {}]
  %s2 = inlined_call_operand.vmem [shape: f32[1,8], index: 2, kind: input, shape index: {}]
  %s3 = inlined_call_operand.hbm [shape: f32[1,1,8], index: 3, kind: output, shape index: {0}]
  %s4 = inlined_call_operand.hbm [shape: s32[1,1,8], index: 4, kind: output, shape index: {1}]
  %s5 = inlined_call_operand.hbm [shape: f32[1,1,8], index: 5, kind: output, shape index: {2}]
  %6 = xla_tuple %s3, %s4, %s5
  %s7 = sld [smem:[#allocation0]]
  $region38: #{tpu_custom_call.1} parent=0
    _
  %s9 = ssub.s32 1, %s7
  %s10 = scalar_select 0, %s9, %s7
  $region1: #{tpu_custom_call.1} parent=0
    #allocation2 [shape = 'u8[512]{0}', space=vmem, size = 0x400, scoped, tag = 'output window, operand 0, single buffered']
    #allocation3 [shape = 's32[1]{0}', space=sflag, size = 0x4, scoped, tag = 'scoped memory for tpu_custom_call.1']
    #allocation4 [shape = 'u8[512]{0}', space=vmem, size = 0x400, scoped, tag = 'output window, operand 1, single buffered']
    #allocation5 [shape = 's32[1]{0}', space=sflag, size = 0x4, scoped, tag = 'scoped memory for tpu_custom_call.1']
    #allocation6 [shape = 'u8[512]{0}', space=vmem, size = 0x400, scoped, tag = 'output window, operand 2, single buffered']
    %11 = vsyncpa [#allocation3], 0
    %12 = vsyncpa [#allocation5], 0
    // Predicated region
    $region2: #{tpu_custom_call.1} parent=1 // pred_check
      _
    $region3: #{tpu_custom_call.1} parent=1 // pred_check_branch
      %14 = sbr.rel (0) target = $region5
    $region4: #{tpu_custom_call.1} parent=1 // pred_region
      _
    $region5: #{tpu_custom_call.1} parent=1 // pred_fallthru
      _
    // Predicated region
    $region6: #{tpu_custom_call.1} parent=1 // pred_check
      _
    $region7: #{tpu_custom_call.1} parent=1 // pred_check_branch
      %16 = sbr.rel (0) target = $region9
    $region8: #{tpu_custom_call.1} parent=1 // pred_region
      _
    $region9: #{tpu_custom_call.1} parent=1 // pred_fallthru
      _
    // Predicated region
    $region10: #{tpu_custom_call.1} parent=1 // pred_check
      _
    $region11: #{tpu_custom_call.1} parent=1 // pred_check_branch
      %18 = sbr.rel (0) target = $region13
    $region12: #{tpu_custom_call.1} parent=1 // pred_region
      _
    $region13: #{tpu_custom_call.1} parent=1 // pred_fallthru
      _
    %s19 = smul.u32 0, 8
    %v20 = vld [vmem:[%s0] sm:$0xff]
    %v21 = vadd.f32 %v20, 0.2
    %v22 = vlaneseq
    %v23 = vshrl.u32 %v22, 7
    %v24 = vlaneseq
    %v25 = vand.u32 %v24, 127
    %v26 = vstv %s19
    %v27 = vadd.s32 %v23, %v26
    %vm28 = vcmp.eq.s32.totalorder %v25, %v27
    %vm29 = vcmp.ge.s32.totalorder %v27, 8
    %vm30 = vmor %vm28, %vm29
    %v31 = vld [vmem:[%s1] sm:$0xff]
    %33 = vset.pattern.permute.xlu0 0
    %34 = vperm.xlu0 %33, %v31
    %v35 = vpop.permute.xlu0 %34
    %v37 = vsub.f32 %v21, %v35
    %v38 = vmax.f32 %v37, 0.0
    %v39 = vsel %vm30, 0.0, %v38
    %vm40 = vcmask 64512
    %v41 = vsel %vm40, %v39, -inf
    %42 = vmax.xlane.f32.xlu0 %v41
    %v43 = vpop.xlane.xlu0 %42
    %vm44 = vcmp.eq.f32.partialorder %v39, %v43
    %v45 = vsel %vm44, %v25, 8
    %v46 = vsel %vm40, %v45, 2147483647
    %v47 = vand.u32 %v46, 65535
    %v48 = vshra.s32 %v46, 16
    %v49 = vcvt.s32.f32 %v47
    %v50 = vcvt.s32.f32 %v48
    %51 = vmin.xlane.f32.xlu0 %v50
    %v52 = vpop.xlane.xlu0 %51
    %vm53 = vcmp.eq.f32.partialorder %v50, %v52
    %v54 = vsel %vm53, %v49, inf
    %55 = vmin.xlane.f32.xlu0 %v54
    %v56 = vpop.xlane.xlu0 %55
    %v57 = vcvt.f32.s32 %v56
    %v58 = vcvt.f32.s32 %v52
    %v59 = vshll.u32 %v58, 16
    %v60 = vadd.s32 %v59, %v57
    %v62 = vlaneseq
    %v63 = vshrl.u32 %v62, 7
    %v64 = vsub.s32 %v25, %v63
    %v65 = vrot.slane %v43, %v64
    %vm67 = vcmask 57344
    %68 = vst.msk [vmem:[#allocation2] sm:$0x1] %vm67, %v65
    %v69 = vlaneseq
    %v70 = vshrl.u32 %v69, 7
    %v71 = vsub.s32 %v25, %v70
    %v72 = vrot.slane %v60, %v71
    %73 = vst.msk [vmem:[#allocation4] sm:$0x1] %vm67, %v72
    %74 = vst.msk [vmem:[#allocation6] sm:$0x1] %vm67, 0.0
    // Predicated region
    $region14: #{tpu_custom_call.1} parent=1 // pred_check
      _
    $region15: #{tpu_custom_call.1} parent=1 // pred_check_branch
      %76 = sbr.rel (0) target = $region17
    $region16: #{tpu_custom_call.1} parent=1 // pred_region
      %s78 = ssub.s32 16, 16
      %79 = vsyncadd [#allocation3], %s78
      %s81 = sshll.u32 [#allocation2], 4
      %s82 = int_to_ptr.vmem [resolvable:$true] %s81
      %84 = dma.vmem_to_hbm [thread:$0]  %s82, 16, %s3, [#allocation3]
    $region17: #{tpu_custom_call.1} parent=1 // pred_fallthru
      _
    // Predicated region
    $region18: #{tpu_custom_call.1} parent=1 // pred_check
      _
    $region19: #{tpu_custom_call.1} parent=1 // pred_check_branch
      %86 = sbr.rel (0) target = $region21
    $region20: #{tpu_custom_call.1} parent=1 // pred_region
      %s88 = ssub.s32 16, 16
      %89 = vsyncadd [#allocation5], %s88
      %s91 = sshll.u32 [#allocation4], 4
      %s92 = int_to_ptr.vmem [resolvable:$true] %s91
      %94 = dma.vmem_to_hbm [thread:$0]  %s92, 16, %s4, [#allocation5]
    $region21: #{tpu_custom_call.1} parent=1 // pred_fallthru
      _
    // Predicated region
    $region22: #{tpu_custom_call.1} parent=1 // pred_check
      _
    $region23: #{tpu_custom_call.1} parent=1 // pred_check_branch
      %96 = sbr.rel (0) target = $region25
    $region24: #{tpu_custom_call.1} parent=1 // pred_region
      %s98 = ssub.s32 16, 16
      %99 = vsyncadd [#allocation5], %s98
      %s101 = sshll.u32 [#allocation6], 4
      %s102 = int_to_ptr.vmem [resolvable:$true] %s101
      %104 = dma.vmem_to_hbm [thread:$0]  %s102, 16, %s5, [#allocation5]
    $region25: #{tpu_custom_call.1} parent=1 // pred_fallthru
      _
    // Predicated region
    $region26: #{tpu_custom_call.1} parent=1 // pred_check
      _
    $region27: #{tpu_custom_call.1} parent=1 // pred_check_branch
      %106 = sbr.rel (0) target = $region29
    $region28: #{tpu_custom_call.1} parent=1 // pred_region
      %107 = dma.done [#allocation3], 16
    $region29: #{tpu_custom_call.1} parent=1 // pred_fallthru
      _
    // Predicated region
    $region30: #{tpu_custom_call.1} parent=1 // pred_check
      _
    $region31: #{tpu_custom_call.1} parent=1 // pred_check_branch
      %109 = sbr.rel (0) target = $region33
    $region32: #{tpu_custom_call.1} parent=1 // pred_region
      %110 = dma.done [#allocation5], 16
    $region33: #{tpu_custom_call.1} parent=1 // pred_fallthru
      _
    // Predicated region
    $region34: #{tpu_custom_call.1} parent=1 // pred_check
      _
    $region35: #{tpu_custom_call.1} parent=1 // pred_check_branch
      %112 = sbr.rel (0) target = $region37
    $region36: #{tpu_custom_call.1} parent=1 // pred_region
      %113 = dma.done [#allocation5], 16
    $region37: #{tpu_custom_call.1} parent=1 // pred_fallthru
      _
    %114 = vsyncpa [#allocation3], 1
    %115 = vsyncpa [#allocation5], 1

</llo_original>
